<compile_context>
chip_gen: v6e
topology: v6e:2x2x1
jax: 0.10.0
libtpu: 0.0.40
codegen_flags: <defaults>
</compile_context>

<pallas_src>
import jax
import jax.numpy as jnp
from jax.experimental import pallas as pl
from jax.experimental.pallas import tpu as pltpu


HIDDEN = 256


def _round_up(n, m):
    return ((n + m - 1) // m) * m


def actor_mlp_kernel(x_ref, w1_ref, b1_ref, w2_ref, b2_ref, w3_ref, b3_ref, o_ref):
    # Layer 1: Linear(in_n, 256) + ReLU   (bf16 MXU inputs, f32 accumulate/epilogue)
    x = x_ref[...].astype(jnp.bfloat16)
    h1 = jnp.dot(x, w1_ref[...], preferred_element_type=jnp.float32)
    h1 = jnp.maximum(h1 + b1_ref[...], 0.0)

    # Layer 2: Linear(256, 256) + ReLU
    h2 = jnp.dot(h1.astype(jnp.bfloat16), w2_ref[...], preferred_element_type=jnp.float32)
    h2 = jnp.maximum(h2 + b2_ref[...], 0.0)

    # Layer 3: Linear(256, out_n) + Tanh.  Un-padded width: the masked store is not
    # the binding slot (DMA/MXU is), and it avoids writing zero-padded lanes to HBM.
    h3 = jnp.dot(h2.astype(jnp.bfloat16), w3_ref[...], preferred_element_type=jnp.float32)
    o_ref[...] = jnp.tanh(h3 + b3_ref[...]).astype(o_ref.dtype)


def _pick_tm(B):
    """Batch tile size.

    Small B: one minimal tile (call is launch/latency-bound anyway).
    Large B: big tiles amortize the ~0.35us per-grid-step overhead, but keep >=4
    grid steps so the batch axis shards across both TensorCores on v7x and the
    x/out DMAs still overlap; cap at 2048 so the per-step footprint stays well
    under the 32 MiB scoped VMEM on every generation (v7x has 64 MiB physical).
    """
    if B <= 256:
        return max(8, _round_up(B, 8))
    return min(2048, _round_up(-(-B // 4), 256))


def actor_forward(x, params):
    """x: [B, in_n] float32; params from init_actor_params; returns [B, out_n] f32."""
    w1, b1, w2, b2, w3, b3 = (
        params["w1"], params["b1"], params["w2"], params["b2"], params["w3"], params["b3"],
    )
    B, in_n = x.shape
    out_n = w3.shape[1]

    TM = _pick_tm(B)
    n_blocks = pl.cdiv(B, TM)
    B_pad = n_blocks * TM
    if B_pad != B:
        x = jnp.pad(x, ((0, B_pad - B), (0, 0)))

    # Weights/biases: constant index_map -> DMA'd once, resident in VMEM across all
    # batch tiles; single pipeline buffer (no point double-buffering constant blocks).
    def resident(shape):
        return pl.BlockSpec(shape, lambda i: (0,) * len(shape),
                            pipeline_mode=pl.Buffered(1))

    flops = 2 * B_pad * (in_n * HIDDEN + HIDDEN * HIDDEN + HIDDEN * out_n)
    bytes_accessed = (
        B_pad * in_n * 4                                  # x in (f32)
        + (w1.size + w2.size + w3.size) * 2               # bf16 weights
        + (b1.size + b2.size + b3.size) * 4               # f32 biases
        + B_pad * out_n * 4                               # un-padded f32 output
    )

    out = pl.pallas_call(
        actor_mlp_kernel,
        out_shape=jax.ShapeDtypeStruct((B_pad, out_n), jnp.float32),
        grid=(n_blocks,),
        in_specs=[
            pl.BlockSpec((TM, in_n), lambda i: (i, 0)),   # x tile (double-buffered)
            resident(w1.shape), resident(b1.shape),
            resident(w2.shape), resident(b2.shape),
            resident(w3.shape), resident(b3.shape),
        ],
        # Last dim equals the full array dim (out_n), so this is a legal block even
        # for tiny out_n; the HBM DMA stays contiguous per row.
        out_specs=pl.BlockSpec((TM, out_n), lambda i: (i, 0)),
        compiler_params=pltpu.CompilerParams(
            dimension_semantics=("parallel",),            # megacore sharding on v7x
            vmem_limit_bytes=32 * 1024 * 1024,            # overrides v5e's 16 MiB default
        ),
        cost_estimate=pl.CostEstimate(
            flops=flops,
            transcendentals=B_pad * out_n,                # tanh
            bytes_accessed=bytes_accessed,
        ),
    )(x, w1, b1, w2, b2, w3, b3)

    if B_pad != B:
        out = out[:B]                                     # drop padded batch rows only
    return out


def init_actor_params(key, in_n, out_n):
    """Deterministic init mimicking nn.Linear default: U(-1/sqrt(fan_in), 1/sqrt(fan_in)).

    Weights stored in bf16 ([in, out] layout) for the MXU path; biases in f32.
    No lane padding on the last layer.
    """
    def linear(key, fan_in, fan_out):
        kw, kb = jax.random.split(key)
        bound = 1.0 / jnp.sqrt(jnp.float32(fan_in))
        w = jax.random.uniform(kw, (fan_in, fan_out), jnp.float32, -bound, bound)
        b = jax.random.uniform(kb, (1, fan_out), jnp.float32, -bound, bound)
        return w, b

    k1, k2, k3 = jax.random.split(key, 3)
    w1, b1 = linear(k1, in_n, HIDDEN)
    w2, b2 = linear(k2, HIDDEN, HIDDEN)
    w3, b3 = linear(k3, HIDDEN, out_n)

    return {
        "w1": w1.astype(jnp.bfloat16), "b1": b1,
        "w2": w2.astype(jnp.bfloat16), "b2": b2,
        "w3": w3.astype(jnp.bfloat16), "b3": b3,
    }


def actor_reference(x, params):
    """Pure-JAX reference using the same bf16-input / f32-accumulate recipe."""
    f32 = jnp.float32
    h1 = jnp.maximum(
        jnp.dot(x.astype(jnp.bfloat16), params["w1"], preferred_element_type=f32)
        + params["b1"], 0.0)
    h2 = jnp.maximum(
        jnp.dot(h1.astype(jnp.bfloat16), params["w2"], preferred_element_type=f32)
        + params["b2"], 0.0)
    h3 = (jnp.dot(h2.astype(jnp.bfloat16), params["w3"], preferred_element_type=f32)
          + params["b3"])
    return jnp.tanh(h3)


if __name__ == "__main__":
    key = jax.random.PRNGKey(0)
    k_param, k_x, k_x2 = jax.random.split(key, 3)

    in_n, out_n = 8, 4   # obs_dim=8, action_dim=4
    params = init_actor_params(k_param, in_n, out_n)

    # Small-batch case (single minimal tile, latency-bound regime).
    batch = 2
    x = jax.random.normal(k_x, (batch, in_n), jnp.float32)
    out = jax.block_until_ready(actor_forward(x, params))
    ref = actor_reference(x, params)
    assert out.shape == (batch, out_n), out.shape
    assert jnp.allclose(out, ref, atol=1e-3, rtol=1e-3), jnp.max(jnp.abs(out - ref))

    # Larger batch exercising the multi-tile grid + batch padding path.
    batch2 = 1000
    x2 = jax.random.normal(k_x2, (batch2, in_n), jnp.float32)
    out2 = jax.block_until_ready(actor_forward(x2, params))
    ref2 = actor_reference(x2, params)
    assert out2.shape == (batch2, out_n), out2.shape
    assert jnp.allclose(out2, ref2, atol=1e-3, rtol=1e-3), jnp.max(jnp.abs(out2 - ref2))

    print("KERNEL_OK")
</pallas_src>

<mosaic_0001>
module attributes {stable_mosaic.version = 11 : i64} {
  func.func @actor_mlp_kernel(%arg0: i32, %arg1: memref<8x8xf32, #tpu.memory_space<vmem>>, %arg2: memref<8x256xbf16, #tpu.memory_space<vmem>>, %arg3: memref<1x256xf32, #tpu.memory_space<vmem>>, %arg4: memref<256x256xbf16, #tpu.memory_space<vmem>>, %arg5: memref<1x256xf32, #tpu.memory_space<vmem>>, %arg6: memref<256x4xbf16, #tpu.memory_space<vmem>>, %arg7: memref<1x4xf32, #tpu.memory_space<vmem>>, %arg8: memref<8x4xf32, #tpu.memory_space<vmem>>) attributes {dimension_semantics = [#tpu.dimension_semantics<parallel>], iteration_bounds = array<i64: 1>, scalar_prefetch = 0 : i64, scratch_operands = 0 : i64, tpu.core_type = #tpu.core_type<tc>, window_params = [{transform_indices = @transform_0, window_bounds = array<i64: 8, 8>}, {pipeline_mode = #tpu.pipeline_mode<synchronous>, transform_indices = @transform_1, window_bounds = array<i64: 8, 256>}, {pipeline_mode = #tpu.pipeline_mode<synchronous>, transform_indices = @transform_2, window_bounds = array<i64: 1, 256>}, {pipeline_mode = #tpu.pipeline_mode<synchronous>, transform_indices = @transform_3, window_bounds = array<i64: 256, 256>}, {pipeline_mode = #tpu.pipeline_mode<synchronous>, transform_indices = @transform_4, window_bounds = array<i64: 1, 256>}, {pipeline_mode = #tpu.pipeline_mode<synchronous>, transform_indices = @transform_5, window_bounds = array<i64: 256, 4>}, {pipeline_mode = #tpu.pipeline_mode<synchronous>, transform_indices = @transform_6, window_bounds = array<i64: 1, 4>}, {transform_indices = @transform_7, window_bounds = array<i64: 8, 4>}]} {
    %c0 = arith.constant 0 : index
    %c0_0 = arith.constant 0 : index
    %0 = vector.load %arg1[%c0, %c0_0] : memref<8x8xf32, #tpu.memory_space<vmem>>, vector<8x8xf32>
    %1 = arith.truncf %0 : vector<8x8xf32> to vector<8x8xbf16>
    %c0_1 = arith.constant 0 : index
    %c0_2 = arith.constant 0 : index
    %2 = vector.load %arg2[%c0_1, %c0_2] : memref<8x256xbf16, #tpu.memory_space<vmem>>, vector<8x256xbf16>
    %cst = arith.constant dense<0.000000e+00> : vector<8x256xf32>
    %3 = tpu.matmul %1, %2, %cst {dimension_numbers = #tpu.dot_dimension_numbers<[1], [0], [0], [1], [0, 0, 1, 1], [], []>} : vector<8x8xbf16>, vector<8x256xbf16>, vector<8x256xf32> -> vector<8x256xf32>
    %c0_3 = arith.constant 0 : index
    %c0_4 = arith.constant 0 : index
    %4 = vector.load %arg3[%c0_3, %c0_4] : memref<1x256xf32, #tpu.memory_space<vmem>>, vector<1x256xf32>
    %5 = vector.broadcast %4 : vector<1x256xf32> to vector<8x256xf32>
    %6 = arith.addf %3, %5 : vector<8x256xf32>
    %cst_5 = arith.constant 0.000000e+00 : f32
    %7 = vector.broadcast %cst_5 : f32 to vector<8x256xf32>
    %8 = arith.maximumf %6, %7 : vector<8x256xf32>
    %9 = arith.truncf %8 : vector<8x256xf32> to vector<8x256xbf16>
    %c0_6 = arith.constant 0 : index
    %c0_7 = arith.constant 0 : index
    %10 = vector.load %arg4[%c0_6, %c0_7] : memref<256x256xbf16, #tpu.memory_space<vmem>>, vector<256x256xbf16>
    %cst_8 = arith.constant dense<0.000000e+00> : vector<8x256xf32>
    %11 = tpu.matmul %9, %10, %cst_8 {dimension_numbers = #tpu.dot_dimension_numbers<[1], [0], [0], [1], [0, 0, 1, 1], [], []>} : vector<8x256xbf16>, vector<256x256xbf16>, vector<8x256xf32> -> vector<8x256xf32>
    %c0_9 = arith.constant 0 : index
    %c0_10 = arith.constant 0 : index
    %12 = vector.load %arg5[%c0_9, %c0_10] : memref<1x256xf32, #tpu.memory_space<vmem>>, vector<1x256xf32>
    %13 = vector.broadcast %12 : vector<1x256xf32> to vector<8x256xf32>
    %14 = arith.addf %11, %13 : vector<8x256xf32>
    %cst_11 = arith.constant 0.000000e+00 : f32
    %15 = vector.broadcast %cst_11 : f32 to vector<8x256xf32>
    %16 = arith.maximumf %14, %15 : vector<8x256xf32>
    %17 = arith.truncf %16 : vector<8x256xf32> to vector<8x256xbf16>
    %c0_12 = arith.constant 0 : index
    %c0_13 = arith.constant 0 : index
    %18 = vector.load %arg6[%c0_12, %c0_13] : memref<256x4xbf16, #tpu.memory_space<vmem>>, vector<256x4xbf16>
    %cst_14 = arith.constant dense<0.000000e+00> : vector<8x4xf32>
    %19 = tpu.matmul %17, %18, %cst_14 {dimension_numbers = #tpu.dot_dimension_numbers<[1], [0], [0], [1], [0, 0, 1, 1], [], []>} : vector<8x256xbf16>, vector<256x4xbf16>, vector<8x4xf32> -> vector<8x4xf32>
    %c0_15 = arith.constant 0 : index
    %c0_16 = arith.constant 0 : index
    %20 = vector.load %arg7[%c0_15, %c0_16] : memref<1x4xf32, #tpu.memory_space<vmem>>, vector<1x4xf32>
    %21 = vector.broadcast %20 : vector<1x4xf32> to vector<8x4xf32>
    %22 = arith.addf %19, %21 : vector<8x4xf32>
    %23 = math.tanh %22 : vector<8x4xf32>
    %c0_17 = arith.constant 0 : index
    %c0_18 = arith.constant 0 : index
    %24 = vector.load %arg8[%c0_17, %c0_18] : memref<8x4xf32, #tpu.memory_space<vmem>>, vector<8x4xf32>
    tpu.vector_store %arg8[%c0_17, %c0_18], %23 {strides = array<i32>} : memref<8x4xf32, #tpu.memory_space<vmem>>, vector<8x4xf32>,
    return
  }
  func.func @transform_0(%arg0: i32) -> (i32, i32) {
    %c0_i32 = arith.constant 0 : i32
    %c0_i32_0 = arith.constant 0 : i32
    return %arg0, %c0_i32 : i32, i32
  }
  func.func @transform_1(%arg0: i32) -> (i32, i32) {
    %c0_i32 = arith.constant 0 : i32
    %c0_i32_0 = arith.constant 0 : i32
    %c0_i32_1 = arith.constant 0 : i32
    return %c0_i32, %c0_i32_0 : i32, i32
  }
  func.func @transform_2(%arg0: i32) -> (i32, i32) {
    %c0_i32 = arith.constant 0 : i32
    %c0_i32_0 = arith.constant 0 : i32
    %c0_i32_1 = arith.constant 0 : i32
    return %c0_i32, %c0_i32_0 : i32, i32
  }
  func.func @transform_3(%arg0: i32) -> (i32, i32) {
    %c0_i32 = arith.constant 0 : i32
    %c0_i32_0 = arith.constant 0 : i32
    %c0_i32_1 = arith.constant 0 : i32
    return %c0_i32, %c0_i32_0 : i32, i32
  }
  func.func @transform_4(%arg0: i32) -> (i32, i32) {
    %c0_i32 = arith.constant 0 : i32
    %c0_i32_0 = arith.constant 0 : i32
    %c0_i32_1 = arith.constant 0 : i32
    return %c0_i32, %c0_i32_0 : i32, i32
  }
  func.func @transform_5(%arg0: i32) -> (i32, i32) {
    %c0_i32 = arith.constant 0 : i32
    %c0_i32_0 = arith.constant 0 : i32
    %c0_i32_1 = arith.constant 0 : i32
    return %c0_i32, %c0_i32_0 : i32, i32
  }
  func.func @transform_6(%arg0: i32) -> (i32, i32) {
    %c0_i32 = arith.constant 0 : i32
    %c0_i32_0 = arith.constant 0 : i32
    %c0_i32_1 = arith.constant 0 : i32
    return %c0_i32, %c0_i32_0 : i32, i32
  }
  func.func @transform_7(%arg0: i32) -> (i32, i32) {
    %c0_i32 = arith.constant 0 : i32
    %c0_i32_0 = arith.constant 0 : i32
    return %arg0, %c0_i32 : i32, i32
  }
}

</mosaic_0001>

<llo_original>
// kernel: tpu_custom_call.1
$region0: #{tpu_custom_call.1}
  #allocation0 [shape = 'u32[]', space=smem, size = 0x4, offset = 0x4, fixed_abs, tag = 'smem constant byte address 0x4 - core index']
  #allocation1 [shape = 'u32[144,128]{1,0:T(1,128)}', space=vmem, size = 0x12000, scoped, tag = 'internal scratch']
  %s0 = inlined_call_operand.vmem [shape: f32[8,8], index: 0, kind: input, shape index: {}]
  %s1 = inlined_call_operand.vmem [shape: bf16[8,256], index: 1, kind: input, shape index: {}]
  %s2 = inlined_call_operand.vmem [shape: f32[1,256], index: 2, kind: input, shape index: {}]
  %s3 = inlined_call_operand.hbm [shape: bf16[256,256], index: 3, kind: input, shape index: {}]
  %s4 = inlined_call_operand.vmem [shape: f32[1,256], index: 4, kind: input, shape index: {}]
  %s5 = inlined_call_operand.vmem [shape: bf16[256,4], index: 5, kind: input, shape index: {}]
  %s6 = inlined_call_operand.vmem [shape: f32[1,4], index: 6, kind: input, shape index: {}]
  %s7 = inlined_call_operand.vmem [shape: f32[8,4], index: 7, kind: output, shape index: {}]
  %s8 = sld [smem:[#allocation0]]
  $region42: #{tpu_custom_call.1} parent=0
    _
  %s10 = ssub.s32 1, %s8
  %s11 = scalar_select 0, %s10, %s8
  $region1: #{tpu_custom_call.1} parent=0
    #allocation2 [shape = 'u8[131072]{0}', space=vmem, size = 0x20000, scoped, tag = 'input window, operand 3, single buffered']
    #allocation3 [shape = 's32[1]{0}', space=sflag, size = 0x4, scoped, tag = 'scoped memory for tpu_custom_call.1']
    %12 = vsyncpa [#allocation3], 0
    // Predicated region
    $region2: #{tpu_custom_call.1} parent=1 // pred_check
      _
    $region3: #{tpu_custom_call.1} parent=1 // pred_check_branch
      %14 = sbr.rel (0) target = $region5
    $region4: #{tpu_custom_call.1} parent=1 // pred_region
      _
    $region5: #{tpu_custom_call.1} parent=1 // pred_fallthru
      _
    // Predicated region
    $region6: #{tpu_custom_call.1} parent=1 // pred_check
      _
    $region7: #{tpu_custom_call.1} parent=1 // pred_check_branch
      %16 = sbr.rel (0) target = $region9
    $region8: #{tpu_custom_call.1} parent=1 // pred_region
      _
    $region9: #{tpu_custom_call.1} parent=1 // pred_fallthru
      _
    // Predicated region
    $region10: #{tpu_custom_call.1} parent=1 // pred_check
      _
    $region11: #{tpu_custom_call.1} parent=1 // pred_check_branch
      %18 = sbr.rel (0) target = $region13
    $region12: #{tpu_custom_call.1} parent=1 // pred_region
      _
    $region13: #{tpu_custom_call.1} parent=1 // pred_fallthru
      _
    // Predicated region
    $region14: #{tpu_custom_call.1} parent=1 // pred_check
      _
    $region15: #{tpu_custom_call.1} parent=1 // pred_check_branch
      %20 = sbr.rel (0) target = $region17
    $region16: #{tpu_custom_call.1} parent=1 // pred_region
      %s22 = ssub.s32 4096, 4096
      %23 = vsyncadd [#allocation3], %s22
      %s24 = sshll.u32 [#allocation2], 4
      %s25 = int_to_ptr.vmem [resolvable:$true] %s24
      %30 = dma.hbm_to_vmem [thread:$0]  %s3, 4096, %s25, [#allocation3], 128, 128, 8
    $region17: #{tpu_custom_call.1} parent=1 // pred_fallthru
      _
    // Predicated region
    $region18: #{tpu_custom_call.1} parent=1 // pred_check
      _
    $region19: #{tpu_custom_call.1} parent=1 // pred_check_branch
      %32 = sbr.rel (0) target = $region21
    $region20: #{tpu_custom_call.1} parent=1 // pred_region
      _
    $region21: #{tpu_custom_call.1} parent=1 // pred_fallthru
      _
    // Predicated region
    $region22: #{tpu_custom_call.1} parent=1 // pred_check
      _
    $region23: #{tpu_custom_call.1} parent=1 // pred_check_branch
      %34 = sbr.rel (0) target = $region25
    $region24: #{tpu_custom_call.1} parent=1 // pred_region
      _
    $region25: #{tpu_custom_call.1} parent=1 // pred_fallthru
      _
    // Predicated region
    $region26: #{tpu_custom_call.1} parent=1 // pred_check
      _
    $region27: #{tpu_custom_call.1} parent=1 // pred_check_branch
      %36 = sbr.rel (0) target = $region29
    $region28: #{tpu_custom_call.1} parent=1 // pred_region
      _
    $region29: #{tpu_custom_call.1} parent=1 // pred_fallthru
      _
    // Predicated region
    $region30: #{tpu_custom_call.1} parent=1 // pred_check
      _
    $region31: #{tpu_custom_call.1} parent=1 // pred_check_branch
      %38 = sbr.rel (0) target = $region33
    $region32: #{tpu_custom_call.1} parent=1 // pred_region
      %39 = dma.done [#allocation3], 4096
    $region33: #{tpu_custom_call.1} parent=1 // pred_fallthru
      _
    %v41 = vld [vmem:[%s0] sm:$0xff]
    %v42 = vpack.c.bf16 %v41, %v41
    %v43 = vld [vmem:[%s1] sm:$0xff]
    %v44 = vld [vmem:[%s2] sm:$0x3]
    %v46 = vlaneseq
    %v47 = vshrl.u32 %v46, 7
    %v48 = vsub.s32 0, %v47
    %v49 = vrot.slane %v44, %v48
    %v50 = vlaneseq
    %v51 = vshrl.u32 %v50, 7
    %v52 = vsub.s32 1, %v51
    %v53 = vrot.slane %v44, %v52
    %v57 = vunpack.c.l.b16 %v43
    %v58 = vunpack.c.h.b16 %v43
    %v59 = vpack.c.b16 %v57, %v57
    %v60 = vpack.c.b16 %v58, %v58
    %vm61 = vcmask 64512
    %v63 = vsel %vm61, %v42, 0
    %vm65 = vcmask 1043456
    %v67 = vsel %vm65, %v59, 0
    %v70 = vsel %vm65, %v60, 0
    %72 = vmatprep.subr.bf16.mxu0 0
    %73 = vmatpush1.bf16.msra.mxu0 0
    %74 = vmatprep.subr.bf16.mxu0 0
    %75 = vmatpush1.bf16.msra.mxu0 0
    %76 = vmatprep.subr.bf16.mxu0 0
    %77 = vmatpush1.bf16.msra.mxu0 0
    %78 = vmatprep.subr.bf16.mxu0 0
    %79 = vmatpush1.bf16.msra.mxu0 0
    %80 = vmatprep.subr.bf16.mxu0 0
    %81 = vmatpush1.bf16.msra.mxu0 0
    %82 = vmatprep.subr.bf16.mxu0 0
    %83 = vmatpush1.bf16.msra.mxu0 0
    %84 = vmatprep.subr.bf16.mxu0 0
    %85 = vmatpush1.bf16.msra.mxu0 0
    %86 = vmatprep.subr.bf16.mxu0 %v70
    %87 = vmatpush1.bf16.msra.mxu0 %v67
    %88 = vmatprep.subr.bf16.mxu0 0
    %89 = vmatpush2.bf16.msra.mxu0 0
    %90 = vmatprep.subr.bf16.mxu0 0
    %91 = vmatpush2.bf16.msra.mxu0 0
    %92 = vmatprep.subr.bf16.mxu0 0
    %93 = vmatpush2.bf16.msra.mxu0 0
    %94 = vmatprep.subr.bf16.mxu0 0
    %95 = vmatpush2.bf16.msra.mxu0 0
    %96 = vmatprep.subr.bf16.mxu0 0
    %97 = vmatpush2.bf16.msra.mxu0 0
    %98 = vmatprep.subr.bf16.mxu0 0
    %99 = vmatpush2.bf16.msra.mxu0 0
    %100 = vmatprep.subr.bf16.mxu0 0
    %101 = vmatpush2.bf16.msra.mxu0 0
    %102 = vmatprep.subr.bf16.mxu0 0
    %103 = vmatpush2.bf16.msra.mxu0 0
    %104 = vmatprep.mubr.bf16.mxu0 0
    %105 = vmatmul.mubr.bf16.gmra.mxu0 %v63
    %v106 = vpop.f32.mrf.mxu0
    %v107 = vadd.f32 %v49, %v106
    %v108 = vpop.f32.mrf.mxu0
    %v109 = vadd.f32 %v53, %v108
    %v110 = vpop.f32.mrf.mxu0
    %v111 = vpop.f32.mrf.mxu0
    %112 = vdwg.mxu0
    %v113 = vmax.f32 %v107, 0.0
    %v114 = vmax.f32 %v109, 0.0
    %v115 = vpack.c.bf16 %v113, %v113
    %v116 = vpack.c.bf16 %v114, %v114
    %v117 = vld [vmem:[#allocation2] sm:$0xff]
    %v118 = vld [vmem:[#allocation2 + $0x8] sm:$0xff]
    %v119 = vld [vmem:[#allocation2 + $0x10] sm:$0xff]
    %v120 = vld [vmem:[#allocation2 + $0x18] sm:$0xff]
    %v121 = vld [vmem:[#allocation2 + $0x20] sm:$0xff]
    %v122 = vld [vmem:[#allocation2 + $0x28] sm:$0xff]
    %v123 = vld [vmem:[#allocation2 + $0x30] sm:$0xff]
    %v124 = vld [vmem:[#allocation2 + $0x38] sm:$0xff]
    %v125 = vld [vmem:[#allocation2 + $0x40] sm:$0xff]
    %v126 = vld [vmem:[#allocation2 + $0x48] sm:$0xff]
    %v127 = vld [vmem:[#allocation2 + $0x50] sm:$0xff]
    %v128 = vld [vmem:[#allocation2 + $0x58] sm:$0xff]
    %v129 = vld [vmem:[#allocation2 + $0x60] sm:$0xff]
    %v130 = vld [vmem:[#allocation2 + $0x68] sm:$0xff]
    %v131 = vld [vmem:[#allocation2 + $0x70] sm:$0xff]
    %v132 = vld [vmem:[#allocation2 + $0x78] sm:$0xff]
    %v133 = vld [vmem:[#allocation2 + $0x80] sm:$0xff]
    %v134 = vld [vmem:[#allocation2 + $0x88] sm:$0xff]
    %v135 = vld [vmem:[#allocation2 + $0x90] sm:$0xff]
    %v136 = vld [vmem:[#allocation2 + $0x98] sm:$0xff]
    %v137 = vld [vmem:[#allocation2 + $0xa0] sm:$0xff]
    %v138 = vld [vmem:[#allocation2 + $0xa8] sm:$0xff]
    %v139 = vld [vmem:[#allocation2 + $0xb0] sm:$0xff]
    %v140 = vld [vmem:[#allocation2 + $0xb8] sm:$0xff]
    %v141 = vld [vmem:[#allocation2 + $0xc0] sm:$0xff]
    %v142 = vld [vmem:[#allocation2 + $0xc8] sm:$0xff]
    %v143 = vld [vmem:[#allocation2 + $0xd0] sm:$0xff]
    %v144 = vld [vmem:[#allocation2 + $0xd8] sm:$0xff]
    %v145 = vld [vmem:[#allocation2 + $0xe0] sm:$0xff]
    %v146 = vld [vmem:[#allocation2 + $0xe8] sm:$0xff]
    %v147 = vld [vmem:[#allocation2 + $0xf0] sm:$0xff]
    %v148 = vld [vmem:[#allocation2 + $0xf8] sm:$0xff]
    %v149 = vld [vmem:[%s4] sm:$0x3]
    %v151 = vlaneseq
    %v152 = vshrl.u32 %v151, 7
    %v153 = vsub.s32 0, %v152
    %v154 = vrot.slane %v149, %v153
    %v155 = vlaneseq
    %v156 = vshrl.u32 %v155, 7
    %v157 = vsub.s32 1, %v156
    %v158 = vrot.slane %v149, %v157
    %v193 = vunpack.c.l.b16 %v117
    %v194 = vunpack.c.h.b16 %v117
    %v195 = vunpack.c.l.b16 %v118
    %v196 = vunpack.c.h.b16 %v118
    %v197 = vunpack.c.l.b16 %v119
    %v198 = vunpack.c.h.b16 %v119
    %v199 = vunpack.c.l.b16 %v120
    %v200 = vunpack.c.h.b16 %v120
    %v201 = vunpack.c.l.b16 %v121
    %v202 = vunpack.c.h.b16 %v121
    %v203 = vunpack.c.l.b16 %v122
    %v204 = vunpack.c.h.b16 %v122
    %v205 = vunpack.c.l.b16 %v123
    %v206 = vunpack.c.h.b16 %v123
    %v207 = vunpack.c.l.b16 %v124
    %v208 = vunpack.c.h.b16 %v124
    %v209 = vunpack.c.l.b16 %v125
    %v210 = vunpack.c.h.b16 %v125
    %v211 = vunpack.c.l.b16 %v126
    %v212 = vunpack.c.h.b16 %v126
    %v213 = vunpack.c.l.b16 %v127
    %v214 = vunpack.c.h.b16 %v127
    %v215 = vunpack.c.l.b16 %v128
    %v216 = vunpack.c.h.b16 %v128
    %v217 = vunpack.c.l.b16 %v129
    %v218 = vunpack.c.h.b16 %v129
    %v219 = vunpack.c.l.b16 %v130
    %v220 = vunpack.c.h.b16 %v130
    %v221 = vunpack.c.l.b16 %v131
    %v222 = vunpack.c.h.b16 %v131
    %v223 = vunpack.c.l.b16 %v132
    %v224 = vunpack.c.h.b16 %v132
    %v225 = vunpack.c.l.b16 %v133
    %v226 = vunpack.c.h.b16 %v133
    %v227 = vunpack.c.l.b16 %v134
    %v228 = vunpack.c.h.b16 %v134
    %v229 = vunpack.c.l.b16 %v135
    %v230 = vunpack.c.h.b16 %v135
    %v231 = vunpack.c.l.b16 %v136
    %v232 = vunpack.c.h.b16 %v136
    %v233 = vunpack.c.l.b16 %v137
    %v234 = vunpack.c.h.b16 %v137
    %v235 = vunpack.c.l.b16 %v138
    %v236 = vunpack.c.h.b16 %v138
    %v237 = vunpack.c.l.b16 %v139
    %v238 = vunpack.c.h.b16 %v139
    %v239 = vunpack.c.l.b16 %v140
    %v240 = vunpack.c.h.b16 %v140
    %v241 = vunpack.c.l.b16 %v141
    %v242 = vunpack.c.h.b16 %v141
    %v243 = vunpack.c.l.b16 %v142
    %v244 = vunpack.c.h.b16 %v142
    %v245 = vunpack.c.l.b16 %v143
    %v246 = vunpack.c.h.b16 %v143
    %v247 = vunpack.c.l.b16 %v144
    %v248 = vunpack.c.h.b16 %v144
    %v249 = vunpack.c.l.b16 %v145
    %v250 = vunpack.c.h.b16 %v145
    %v251 = vunpack.c.l.b16 %v146
    %v252 = vunpack.c.h.b16 %v146
    %v253 = vunpack.c.l.b16 %v147
    %v254 = vunpack.c.h.b16 %v147
    %v255 = vunpack.c.l.b16 %v148
    %v256 = vunpack.c.h.b16 %v148
    %v257 = vpack.c.b16 %v195, %v193
    %v258 = vpack.c.b16 %v196, %v194
    %v259 = vpack.c.b16 %v199, %v197
    %v260 = vpack.c.b16 %v200, %v198
    %v261 = vpack.c.b16 %v203, %v201
    %v262 = vpack.c.b16 %v204, %v202
    %v263 = vpack.c.b16 %v207, %v205
    %v264 = vpack.c.b16 %v208, %v206
    %v265 = vpack.c.b16 %v211, %v209
    %v266 = vpack.c.b16 %v212, %v210
    %v267 = vpack.c.b16 %v215, %v213
    %v268 = vpack.c.b16 %v216, %v214
    %v269 = vpack.c.b16 %v219, %v217
    %v270 = vpack.c.b16 %v220, %v218
    %v271 = vpack.c.b16 %v223, %v221
    %v272 = vpack.c.b16 %v224, %v222
    %v273 = vpack.c.b16 %v227, %v225
    %v274 = vpack.c.b16 %v228, %v226
    %v275 = vpack.c.b16 %v231, %v229
    %v276 = vpack.c.b16 %v232, %v230
    %v277 = vpack.c.b16 %v235, %v233
    %v278 = vpack.c.b16 %v236, %v234
    %v279 = vpack.c.b16 %v239, %v237
    %v280 = vpack.c.b16 %v240, %v238
    %v281 = vpack.c.b16 %v243, %v241
    %v282 = vpack.c.b16 %v244, %v242
    %v283 = vpack.c.b16 %v247, %v245
    %v284 = vpack.c.b16 %v248, %v246
    %v285 = vpack.c.b16 %v251, %v249
    %v286 = vpack.c.b16 %v252, %v250
    %v287 = vpack.c.b16 %v255, %v253
    %v288 = vpack.c.b16 %v256, %v254
    %321 = vmatprep.subr.bf16.mxu0 %v272
    %322 = vmatpush1.bf16.msra.mxu0 %v271
    %323 = vmatprep.subr.bf16.mxu0 %v270
    %324 = vmatpush1.bf16.msra.mxu0 %v269
    %325 = vmatprep.subr.bf16.mxu0 %v268
    %326 = vmatpush1.bf16.msra.mxu0 %v267
    %327 = vmatprep.subr.bf16.mxu0 %v266
    %328 = vmatpush1.bf16.msra.mxu0 %v265
    %329 = vmatprep.subr.bf16.mxu0 %v264
    %330 = vmatpush1.bf16.msra.mxu0 %v263
    %331 = vmatprep.subr.bf16.mxu0 %v262
    %332 = vmatpush1.bf16.msra.mxu0 %v261
    %333 = vmatprep.subr.bf16.mxu0 %v260
    %334 = vmatpush1.bf16.msra.mxu0 %v259
    %335 = vmatprep.subr.bf16.mxu0 %v258
    %336 = vmatpush1.bf16.msra.mxu0 %v257
    %337 = vmatprep.subr.bf16.mxu0 %v288
    %338 = vmatpush2.bf16.msra.mxu0 %v287
    %339 = vmatprep.subr.bf16.mxu0 %v286
    %340 = vmatpush2.bf16.msra.mxu0 %v285
    %341 = vmatprep.subr.bf16.mxu0 %v284
    %342 = vmatpush2.bf16.msra.mxu0 %v283
    %343 = vmatprep.subr.bf16.mxu0 %v282
    %344 = vmatpush2.bf16.msra.mxu0 %v281
    %345 = vmatprep.subr.bf16.mxu0 %v280
    %346 = vmatpush2.bf16.msra.mxu0 %v279
    %347 = vmatprep.subr.bf16.mxu0 %v278
    %348 = vmatpush2.bf16.msra.mxu0 %v277
    %349 = vmatprep.subr.bf16.mxu0 %v276
    %350 = vmatpush2.bf16.msra.mxu0 %v275
    %351 = vmatprep.subr.bf16.mxu0 %v274
    %352 = vmatpush2.bf16.msra.mxu0 %v273
    %353 = vmatprep.mubr.bf16.mxu0 %v116
    %354 = vmatmul.mubr.bf16.gmra.mxu0 %v115
    %v355 = vpop.f32.mrf.mxu0
    %v356 = vadd.f32 %v154, %v355
    %v357 = vpop.f32.mrf.mxu0
    %v358 = vadd.f32 %v158, %v357
    %v359 = vpop.f32.mrf.mxu0
    %v360 = vpop.f32.mrf.mxu0
    %361 = vdwg.mxu0
    %v362 = vmax.f32 %v356, 0.0
    %v363 = vmax.f32 %v358, 0.0
    %v364 = vpack.c.bf16 %v362, %v362
    %v365 = vpack.c.bf16 %v363, %v363
    %v366 = vld [vmem:[%s5] sm:$0xf]
    %v367 = vld [vmem:[%s5 + $0x4] sm:$0xf]
    %v368 = vld [vmem:[%s5 + $0x8] sm:$0xf]
    %v369 = vld [vmem:[%s5 + $0xc] sm:$0xf]
    %v370 = vld [vmem:[%s5 + $0x10] sm:$0xf]
    %v371 = vld [vmem:[%s5 + $0x14] sm:$0xf]
    %v372 = vld [vmem:[%s5 + $0x18] sm:$0xf]
    %v373 = vld [vmem:[%s5 + $0x1c] sm:$0xf]
    %v374 = vld [vmem:[%s5 + $0x20] sm:$0xf]
    %v375 = vld [vmem:[%s5 + $0x24] sm:$0xf]
    %v376 = vld [vmem:[%s5 + $0x28] sm:$0xf]
    %v377 = vld [vmem:[%s5 + $0x2c] sm:$0xf]
    %v378 = vld [vmem:[%s5 + $0x30] sm:$0xf]
    %v379 = vld [vmem:[%s5 + $0x34] sm:$0xf]
    %v380 = vld [vmem:[%s5 + $0x38] sm:$0xf]
    %v381 = vld [vmem:[%s5 + $0x3c] sm:$0xf]
    %v382 = vld [vmem:[%s5 + $0x40] sm:$0xf]
    %v383 = vld [vmem:[%s5 + $0x44] sm:$0xf]
    %v384 = vld [vmem:[%s5 + $0x48] sm:$0xf]
    %v385 = vld [vmem:[%s5 + $0x4c] sm:$0xf]
    %v386 = vld [vmem:[%s5 + $0x50] sm:$0xf]
    %v387 = vld [vmem:[%s5 + $0x54] sm:$0xf]
    %v388 = vld [vmem:[%s5 + $0x58] sm:$0xf]
    %v389 = vld [vmem:[%s5 + $0x5c] sm:$0xf]
    %v390 = vld [vmem:[%s5 + $0x60] sm:$0xf]
    %v391 = vld [vmem:[%s5 + $0x64] sm:$0xf]
    %v392 = vld [vmem:[%s5 + $0x68] sm:$0xf]
    %v393 = vld [vmem:[%s5 + $0x6c] sm:$0xf]
    %v394 = vld [vmem:[%s5 + $0x70] sm:$0xf]
    %v395 = vld [vmem:[%s5 + $0x74] sm:$0xf]
    %v396 = vld [vmem:[%s5 + $0x78] sm:$0xf]
    %v397 = vld [vmem:[%s5 + $0x7c] sm:$0xf]
    %v398 = vld [vmem:[%s6] sm:$0x1]
    %v400 = vlaneseq
    %v401 = vshrl.u32 %v400, 7
    %v402 = vsub.s32 0, %v401
    %v403 = vrot.slane %v398, %v402
    %v437 = vunpack.c.l.b16 %v366
    %v438 = vunpack.c.l.b16 %v367
    %v439 = vunpack.c.l.b16 %v368
    %v440 = vunpack.c.l.b16 %v369
    %v441 = vunpack.c.l.b16 %v370
    %v442 = vunpack.c.l.b16 %v371
    %v443 = vunpack.c.l.b16 %v372
    %v444 = vunpack.c.l.b16 %v373
    %v445 = vunpack.c.l.b16 %v374
    %v446 = vunpack.c.l.b16 %v375
    %v447 = vunpack.c.l.b16 %v376
    %v448 = vunpack.c.l.b16 %v377
    %v449 = vunpack.c.l.b16 %v378
    %v450 = vunpack.c.l.b16 %v379
    %v451 = vunpack.c.l.b16 %v380
    %v452 = vunpack.c.l.b16 %v381
    %v453 = vunpack.c.l.b16 %v382
    %v454 = vunpack.c.l.b16 %v383
    %v455 = vunpack.c.l.b16 %v384
    %v456 = vunpack.c.l.b16 %v385
    %v457 = vunpack.c.l.b16 %v386
    %v458 = vunpack.c.l.b16 %v387
    %v459 = vunpack.c.l.b16 %v388
    %v460 = vunpack.c.l.b16 %v389
    %v461 = vunpack.c.l.b16 %v390
    %v462 = vunpack.c.l.b16 %v391
    %v463 = vunpack.c.l.b16 %v392
    %v464 = vunpack.c.l.b16 %v393
    %v465 = vunpack.c.l.b16 %v394
    %v466 = vunpack.c.l.b16 %v395
    %v467 = vunpack.c.l.b16 %v396
    %v468 = vunpack.c.l.b16 %v397
    %v469 = vpack.c.b16 %v438, %v437
    %v470 = vpack.c.b16 %v440, %v439
    %v471 = vpack.c.b16 %v442, %v441
    %v472 = vpack.c.b16 %v444, %v443
    %v473 = vpack.c.b16 %v446, %v445
    %v474 = vpack.c.b16 %v448, %v447
    %v475 = vpack.c.b16 %v450, %v449
    %v476 = vpack.c.b16 %v452, %v451
    %v477 = vpack.c.b16 %v454, %v453
    %v478 = vpack.c.b16 %v456, %v455
    %v479 = vpack.c.b16 %v458, %v457
    %v480 = vpack.c.b16 %v460, %v459
    %v481 = vpack.c.b16 %v462, %v461
    %v482 = vpack.c.b16 %v464, %v463
    %v483 = vpack.c.b16 %v466, %v465
    %v484 = vpack.c.b16 %v468, %v467
    %501 = vmatprep.subr.bf16.mxu0 0
    %502 = vmatpush1.bf16.msra.mxu0 %v476
    %503 = vmatprep.subr.bf16.mxu0 0
    %504 = vmatpush1.bf16.msra.mxu0 %v475
    %505 = vmatprep.subr.bf16.mxu0 0
    %506 = vmatpush1.bf16.msra.mxu0 %v474
    %507 = vmatprep.subr.bf16.mxu0 0
    %508 = vmatpush1.bf16.msra.mxu0 %v473
    %509 = vmatprep.subr.bf16.mxu0 0
    %510 = vmatpush1.bf16.msra.mxu0 %v472
    %511 = vmatprep.subr.bf16.mxu0 0
    %512 = vmatpush1.bf16.msra.mxu0 %v471
    %513 = vmatprep.subr.bf16.mxu0 0
    %514 = vmatpush1.bf16.msra.mxu0 %v470
    %515 = vmatprep.subr.bf16.mxu0 0
    %516 = vmatpush1.bf16.msra.mxu0 %v469
    %517 = vmatprep.subr.bf16.mxu0 0
    %518 = vmatpush2.bf16.msra.mxu0 %v484
    %519 = vmatprep.subr.bf16.mxu0 0
    %520 = vmatpush2.bf16.msra.mxu0 %v483
    %521 = vmatprep.subr.bf16.mxu0 0
    %522 = vmatpush2.bf16.msra.mxu0 %v482
    %523 = vmatprep.subr.bf16.mxu0 0
    %524 = vmatpush2.bf16.msra.mxu0 %v481
    %525 = vmatprep.subr.bf16.mxu0 0
    %526 = vmatpush2.bf16.msra.mxu0 %v480
    %527 = vmatprep.subr.bf16.mxu0 0
    %528 = vmatpush2.bf16.msra.mxu0 %v479
    %529 = vmatprep.subr.bf16.mxu0 0
    %530 = vmatpush2.bf16.msra.mxu0 %v478
    %531 = vmatprep.subr.bf16.mxu0 0
    %532 = vmatpush2.bf16.msra.mxu0 %v477
    %533 = vmatprep.mubr.bf16.mxu0 %v365
    %534 = vmatmul.mubr.bf16.gmra.mxu0 %v364
    %v535 = vpop.f32.mrf.mxu0
    %v536 = vadd.f32 %v403, %v535
    %v537 = vpop.f32.mrf.mxu0
    %v538 = vpop.f32.mrf.mxu0
    %v539 = vpop.f32.mrf.mxu0
    %540 = vdwg.mxu0
    %v541 = vtanh.pop %v536
    %vm542 = vcmask 31744
    %543 = vst.msk [vmem:[%s7] sm:$0xff] %vm542, %v541
    // Predicated region
    $region34: #{tpu_custom_call.1} parent=1 // pred_check
      _
    $region35: #{tpu_custom_call.1} parent=1 // pred_check_branch
      %545 = sbr.rel (0) target = $region37
    $region36: #{tpu_custom_call.1} parent=1 // pred_region
      _
    $region37: #{tpu_custom_call.1} parent=1 // pred_fallthru
      _
    // Predicated region
    $region38: #{tpu_custom_call.1} parent=1 // pred_check
      _
    $region39: #{tpu_custom_call.1} parent=1 // pred_check_branch
      %547 = sbr.rel (0) target = $region41
    $region40: #{tpu_custom_call.1} parent=1 // pred_region
      _
    $region41: #{tpu_custom_call.1} parent=1 // pred_fallthru
      _
    %548 = vsyncpa [#allocation3], 1

</llo_original>
